<compile_context>
chip_gen: v7x
topology: tpu7x:2x2x1
jax: 0.10.0
libtpu: 0.0.40
codegen_flags: <defaults>
</compile_context>

<pallas_src>
import functools
from typing import NamedTuple

import jax
import jax.numpy as jnp
from jax.experimental import pallas as pl
from jax.experimental.pallas import tpu as pltpu


def _round_up(x, m):
    return ((x + m - 1) // m) * m


def _detect_mxu_width():
    """128-wide MXU on v2-v5 chips, 256-wide on v6e/v7x."""
    try:
        kind = jax.devices()[0].device_kind.lower()
        for tag in ("v2", "v3", "v4", "v5"):
            if tag in kind:
                return 128
    except Exception:
        pass
    return 256


def _choose_group_size(n_members, widest, mxu_width):
    """Members packed per grid step.

    Packs as many members as fit one MXU pass (G * max(H) <= mxu_width).
    There is no ">=2 grid steps" back-off: with batch tiling the batch axis
    already provides parallel grid work for v7x's two TensorCores.
    If n_members has no decent divisor <= target, the full target is returned
    and the caller zero-pads the member axis (far cheaper than G=1).
    """
    target = max(1, mxu_width // max(widest, 1))
    target = min(target, n_members)
    if target <= 1:
        return 1
    best_div = max(d for d in range(1, target + 1) if n_members % d == 0)
    if 2 * best_div > target:          # good enough divisor -> no member padding
        return best_div
    return target                      # caller pads n_members up to multiple of G


class _Meta(NamedTuple):
    n_members: int
    n_padded: int
    G: int
    ng: int
    din: int
    h1: int
    h2: int
    dout: int
    gdo: int
    gdo_pad: int


def pack_ensemble_params(params, *, group_size=None, mxu_width=None, mxu_dtype=None):
    """One-time wrapper-side layout work.  Cache the result (see PallasEnsemble).

    params: stacked PyTorch-layout weights:
      w_l: (n_members, out_l, in_l), b_l: (n_members, out_l)
    """
    w1, b1 = params["w1"], params["b1"]
    w2, b2 = params["w2"], params["b2"]
    w3, b3 = params["w3"], params["b3"]

    n, h1, din = w1.shape
    h2 = w2.shape[1]
    dout = w3.shape[1]

    mxu_width = mxu_width or _detect_mxu_width()
    G = group_size or _choose_group_size(n, max(h1, h2, dout), mxu_width)
    n_pad = _round_up(n, G)
    if n_pad != n:  # awkward / prime member counts: zero-pad dummy members
        pad = n_pad - n
        w1 = jnp.pad(w1, ((0, pad), (0, 0), (0, 0)))
        w2 = jnp.pad(w2, ((0, pad), (0, 0), (0, 0)))
        w3 = jnp.pad(w3, ((0, pad), (0, 0), (0, 0)))
        b1 = jnp.pad(b1, ((0, pad), (0, 0)))
        b2 = jnp.pad(b2, ((0, pad), (0, 0)))
        b3 = jnp.pad(b3, ((0, pad), (0, 0)))
    ng = n_pad // G
    gdo = G * dout
    gdo_pad = _round_up(gdo, 128)      # lane-dense output stores (no vst.msk)

    w_dtype = jnp.dtype(mxu_dtype) if mxu_dtype is not None else w1.dtype

    # Pre-transpose to (in, out) so the kernel never transposes.
    w1t = jnp.swapaxes(w1, 1, 2).astype(w_dtype)   # (n_pad, din, h1)
    w2t = jnp.swapaxes(w2, 1, 2).astype(w_dtype)   # (n_pad, h1, h2)
    w3t = jnp.swapaxes(w3, 1, 2).astype(w_dtype)   # (n_pad, h2, dout)

    # Layer 1: pack group members along the output-column (lane) axis.
    w1p = jnp.transpose(w1t.reshape(ng, G, din, h1),
                        (0, 2, 1, 3)).reshape(ng, din, G * h1)

    # Layers 2/3: block-diagonal packing -> one lane-dense matmul per layer.
    def _block_diag(w, i, o):
        wg = w.reshape(ng, G, i, o)
        eye = jnp.eye(G, dtype=w.dtype)
        bd = jnp.einsum("ab,sbrc->sarbc", eye, wg)
        return bd.reshape(ng, G * i, G * o)

    w2p = _block_diag(w2t, h1, h2)                     # (ng, G*h1, G*h2)
    w3p = _block_diag(w3t, h2, dout)                   # (ng, G*h2, G*dout)
    if gdo_pad != gdo:
        w3p = jnp.pad(w3p, ((0, 0), (0, 0), (0, gdo_pad - gdo)))

    # Biases: three separate, tile-aligned, pre-f32 refs (no in-kernel lane
    # slicing at unaligned offsets and no per-step cast).
    b1p = b1.reshape(ng, 1, G * h1).astype(jnp.float32)
    b2p = b2.reshape(ng, 1, G * h2).astype(jnp.float32)
    b3p = b3.reshape(ng, 1, gdo).astype(jnp.float32)
    if gdo_pad != gdo:
        b3p = jnp.pad(b3p, ((0, 0), (0, 0), (0, gdo_pad - gdo)))

    meta = _Meta(n, n_pad, G, ng, din, h1, h2, dout, gdo, gdo_pad)
    return (w1p, w2p, w3p, b1p, b2p, b3p), meta


def _ensemble_mlp_kernel(x_ref, w1_ref, w2_ref, w3_ref, b1_ref, b2_ref, b3_ref,
                         o_ref):
    # x_ref : (TB, Din)           -- shared across members (== Ensemble.expand)
    # w1_ref: (1, Din, G*H1)      -- lane-packed layer-1 weights, (in, out) layout
    # w2_ref: (1, G*H1, G*H2)     -- block-diagonal packed layer-2 weights
    # w3_ref: (1, G*H2, GDO_PAD)  -- block-diagonal packed layer-3 weights (lane-padded)
    # b*_ref: (1, 1, width)       -- pre-f32, tile-aligned biases
    # o_ref : (1, TB, GDO_PAD)
    #
    # Explicit MXU-feed decision happens in the wrapper via operand dtype:
    # f32 operands run true (multi-pass) f32 matmuls; bf16 operands run at the
    # MXU's native rate.  Accumulation / bias / ReLU stay in f32 either way.
    x = x_ref[...].astype(w1_ref.dtype)
    h = jnp.dot(x, w1_ref[0], preferred_element_type=jnp.float32)
    h = jnp.maximum(h + b1_ref[0], 0.0)
    h = jnp.dot(h.astype(w2_ref.dtype), w2_ref[0],
                preferred_element_type=jnp.float32)
    h = jnp.maximum(h + b2_ref[0], 0.0)
    y = jnp.dot(h.astype(w3_ref.dtype), w3_ref[0],
                preferred_element_type=jnp.float32)
    y = y + b3_ref[0]
    o_ref[0] = y.astype(o_ref.dtype)


def _vmem_limit_bytes(tb, din, gh1, gh2, gdo_pad, x_itemsize, w_itemsize):
    """Honest per-step VMEM budget (double-buffered) + headroom."""
    dbuf = 2
    x_b = dbuf * tb * din * x_itemsize
    o_b = dbuf * tb * gdo_pad * x_itemsize
    w_b = dbuf * (din * gh1 + gh1 * gh2 + gh2 * gdo_pad) * w_itemsize
    bias_b = dbuf * (gh1 + gh2 + gdo_pad) * 4
    act_b = 2 * tb * max(gh1, gh2, gdo_pad) * 4        # f32 intermediates
    total = int(1.5 * (x_b + o_b + w_b + bias_b + act_b)) + (4 << 20)
    return max(8 << 20, min(total, 48 << 20))          # fits v7x's 64 MiB VMEM


def _ensemble_forward_impl(x, w1p, w2p, w3p, b1p, b2p, b3p, *,
                           meta, batch_tile=None):
    n, n_pad, G, ng = meta.n_members, meta.n_padded, meta.G, meta.ng
    din, dout = meta.din, meta.dout
    gdo, gdo_pad = meta.gdo, meta.gdo_pad
    gh1, gh2 = G * meta.h1, G * meta.h2

    batch = x.shape[0]
    x_itemsize = jnp.dtype(x.dtype).itemsize
    w_itemsize = jnp.dtype(w1p.dtype).itemsize
    granule = {4: 8, 2: 16, 1: 32}.get(x_itemsize, 8)  # dtype sublane granule

    if batch_tile is None:
        batch_tile = 512 if batch >= 512 else _round_up(batch, granule)
    tb = min(_round_up(batch_tile, granule), _round_up(batch, granule))
    padded_batch = _round_up(batch, tb)
    if padded_batch != batch:
        x = jnp.pad(x, ((0, padded_batch - batch), (0, 0)))
    nbt = padded_batch // tb

    # Pick the resident operand: keep whichever side would otherwise be
    # re-read from HBM the most (weights across batch steps vs. x across
    # member-group steps).
    x_bytes = padded_batch * din * x_itemsize
    w_bytes = ng * ((din * gh1 + gh1 * gh2 + gh2 * gdo_pad) * w_itemsize
                    + (gh1 + gh2 + gdo_pad) * 4)
    batch_inner = (ng * x_bytes + w_bytes) <= (x_bytes + nbt * w_bytes)

    if batch_inner:
        grid = (ng, nbt)
        x_map = lambda g, b: (b, 0)
        g_map = lambda g, b: (g, 0, 0)
        o_map = lambda g, b: (g, b, 0)
    else:
        grid = (nbt, ng)
        x_map = lambda b, g: (b, 0)
        g_map = lambda b, g: (g, 0, 0)
        o_map = lambda b, g: (g, b, 0)

    # TODO(synk): the group-constant weight/bias specs could use
    # pipeline_mode=pl.Buffered(1) to halve their (already tiny) VMEM footprint.
    grid_spec = pltpu.PrefetchScalarGridSpec(
        num_scalar_prefetch=0,
        grid=grid,
        in_specs=[
            pl.BlockSpec((tb, din), x_map),
            pl.BlockSpec((1, din, gh1), g_map),
            pl.BlockSpec((1, gh1, gh2), g_map),
            pl.BlockSpec((1, gh2, gdo_pad), g_map),
            pl.BlockSpec((1, 1, gh1), g_map),
            pl.BlockSpec((1, 1, gh2), g_map),
            pl.BlockSpec((1, 1, gdo_pad), g_map),
        ],
        out_specs=pl.BlockSpec((1, tb, gdo_pad), o_map),
    )

    out = pl.pallas_call(
        _ensemble_mlp_kernel,
        out_shape=jax.ShapeDtypeStruct((ng, padded_batch, gdo_pad), x.dtype),
        grid_spec=grid_spec,
        compiler_params=pltpu.CompilerParams(
            dimension_semantics=("parallel", "parallel"),
            vmem_limit_bytes=_vmem_limit_bytes(tb, din, gh1, gh2, gdo_pad,
                                               x_itemsize, w_itemsize),
        ),
    )(x, w1p, w2p, w3p, b1p, b2p, b3p)

    out = out[:, :batch, :gdo]                          # strip batch/lane padding
    out = out.reshape(ng, batch, G, dout)
    out = jnp.transpose(out, (0, 2, 1, 3)).reshape(n_pad, batch, dout)
    return out[:n, :, :]                                # strip dummy members


class PallasEnsemble:
    """objectrl Ensemble.forward (3-layer MLP members) as a Pallas TPU kernel.

    The wrapper-side packing runs exactly once at construction; the jitted
    forward only runs the Pallas kernel (plus cheap pad/strip/transpose).
    """

    def __init__(self, params, *, group_size=None, mxu_width=None,
                 mxu_dtype=None, batch_tile=None):
        packed, meta = pack_ensemble_params(
            params, group_size=group_size, mxu_width=mxu_width,
            mxu_dtype=mxu_dtype)
        # Materialize once so the packing cost is paid here, not per call.
        self.packed = tuple(jax.block_until_ready(jnp.asarray(p)) for p in packed)
        self.meta = meta
        self._fwd = jax.jit(functools.partial(
            _ensemble_forward_impl, meta=meta, batch_tile=batch_tile))

    def __call__(self, x):
        # TODO(synk): 3-D per-member inputs (Ensemble.expand no-op path) are not
        # handled here; this kernel implements the common 2-D broadcast case.
        return self._fwd(x, *self.packed)


def _init_stacked_params(key, n_members, din, h1, h2, dout, dtype=jnp.float32):
    """Deterministic stand-in for torch.func.stack_module_state on n MLPs."""
    ks = jax.random.split(key, 6)
    scale = 0.1
    return {
        "w1": scale * jax.random.normal(ks[0], (n_members, h1, din), dtype),
        "b1": scale * jax.random.normal(ks[1], (n_members, h1), dtype),
        "w2": scale * jax.random.normal(ks[2], (n_members, h2, h1), dtype),
        "b2": scale * jax.random.normal(ks[3], (n_members, h2), dtype),
        "w3": scale * jax.random.normal(ks[4], (n_members, dout, h2), dtype),
        "b3": scale * jax.random.normal(ks[5], (n_members, dout), dtype),
    }


def _reference_forward(x, params):
    """Pure-JAX reference mirroring torch.func.vmap(functional_call) in f32."""
    hp = jax.lax.Precision.HIGHEST

    def one_member(w1, b1, w2, b2, w3, b3):
        a = jnp.maximum(jnp.dot(x, w1.T, precision=hp) + b1, 0.0)
        a = jnp.maximum(jnp.dot(a, w2.T, precision=hp) + b2, 0.0)
        return jnp.dot(a, w3.T, precision=hp) + b3

    return jax.vmap(one_member)(params["w1"], params["b1"],
                                params["w2"], params["b2"],
                                params["w3"], params["b3"])


if __name__ == "__main__":
    # Small shapes that exercise member padding (5 % 2 != 0), batch padding
    # (12 -> 16 rows) and lane-padded output stores (G*dout = 8 -> 128).
    n_members = 5
    batch = 12
    din, h1, h2, dout = 32, 32, 32, 4

    key = jax.random.PRNGKey(0)
    k_x, k_p = jax.random.split(key)
    x = jax.random.normal(k_x, (batch, din), jnp.float32)
    params = _init_stacked_params(k_p, n_members, din, h1, h2, dout)

    ens = PallasEnsemble(params, group_size=2)   # packing happens once, here
    out = jax.block_until_ready(ens(x))

    ref = _reference_forward(x, params)
    assert out.shape == (n_members, batch, dout), out.shape
    err = float(jnp.max(jnp.abs(out - ref)))
    assert jnp.allclose(out, ref, atol=1e-4, rtol=1e-4), err

    print("KERNEL_OK")
</pallas_src>

<mosaic_0001>
module attributes {stable_mosaic.version = 11 : i64} {
  func.func @_ensemble_mlp_kernel(%arg0: i32, %arg1: i32, %arg2: memref<16x32xf32, #tpu.memory_space<vmem>>, %arg3: memref<1x32x64xf32, #tpu.memory_space<vmem>>, %arg4: memref<1x64x64xf32, #tpu.memory_space<vmem>>, %arg5: memref<1x64x128xf32, #tpu.memory_space<vmem>>, %arg6: memref<1x1x64xf32, #tpu.memory_space<vmem>>, %arg7: memref<1x1x64xf32, #tpu.memory_space<vmem>>, %arg8: memref<1x1x128xf32, #tpu.memory_space<vmem>>, %arg9: memref<1x16x128xf32, #tpu.memory_space<vmem>>) attributes {dimension_semantics = [#tpu.dimension_semantics<parallel>, #tpu.dimension_semantics<parallel>], iteration_bounds = array<i64: 1, 3>, scalar_prefetch = 0 : i64, scratch_operands = 0 : i64, tpu.core_type = #tpu.core_type<tc>, window_params = [{transform_indices = @transform_0, window_bounds = array<i64: 16, 32>}, {transform_indices = @transform_1, window_bounds = array<i64: 1, 32, 64>}, {transform_indices = @transform_2, window_bounds = array<i64: 1, 64, 64>}, {transform_indices = @transform_3, window_bounds = array<i64: 1, 64, 128>}, {transform_indices = @transform_4, window_bounds = array<i64: 1, 1, 64>}, {transform_indices = @transform_5, window_bounds = array<i64: 1, 1, 64>}, {transform_indices = @transform_6, window_bounds = array<i64: 1, 1, 128>}, {transform_indices = @transform_7, window_bounds = array<i64: 1, 16, 128>}]} {
    %c0 = arith.constant 0 : index
    %c0_0 = arith.constant 0 : index
    %0 = vector.load %arg2[%c0, %c0_0] : memref<16x32xf32, #tpu.memory_space<vmem>>, vector<16x32xf32>
    %c0_1 = arith.constant 0 : index
    %c0_2 = arith.constant 0 : index
    %c0_3 = arith.constant 0 : index
    %1 = vector.load %arg3[%c0_1, %c0_2, %c0_3] : memref<1x32x64xf32, #tpu.memory_space<vmem>>, vector<1x32x64xf32>
    %2 = vector.shape_cast %1 : vector<1x32x64xf32> to vector<32x64xf32>
    %cst = arith.constant dense<0.000000e+00> : vector<16x64xf32>
    %3 = tpu.matmul %0, %2, %cst {dimension_numbers = #tpu.dot_dimension_numbers<[1], [0], [0], [1], [0, 0, 1, 1], [], []>} : vector<16x32xf32>, vector<32x64xf32>, vector<16x64xf32> -> vector<16x64xf32>
    %c0_4 = arith.constant 0 : index
    %c0_5 = arith.constant 0 : index
    %c0_6 = arith.constant 0 : index
    %4 = vector.load %arg6[%c0_4, %c0_5, %c0_6] : memref<1x1x64xf32, #tpu.memory_space<vmem>>, vector<1x1x64xf32>
    %5 = vector.shape_cast %4 : vector<1x1x64xf32> to vector<1x64xf32>
    %6 = vector.broadcast %5 : vector<1x64xf32> to vector<16x64xf32>
    %7 = arith.addf %3, %6 : vector<16x64xf32>
    %cst_7 = arith.constant 0.000000e+00 : f32
    %8 = vector.broadcast %cst_7 : f32 to vector<16x64xf32>
    %9 = arith.maximumf %7, %8 : vector<16x64xf32>
    %c0_8 = arith.constant 0 : index
    %c0_9 = arith.constant 0 : index
    %c0_10 = arith.constant 0 : index
    %10 = vector.load %arg4[%c0_8, %c0_9, %c0_10] : memref<1x64x64xf32, #tpu.memory_space<vmem>>, vector<1x64x64xf32>
    %11 = vector.shape_cast %10 : vector<1x64x64xf32> to vector<64x64xf32>
    %cst_11 = arith.constant dense<0.000000e+00> : vector<16x64xf32>
    %12 = tpu.matmul %9, %11, %cst_11 {dimension_numbers = #tpu.dot_dimension_numbers<[1], [0], [0], [1], [0, 0, 1, 1], [], []>} : vector<16x64xf32>, vector<64x64xf32>, vector<16x64xf32> -> vector<16x64xf32>
    %c0_12 = arith.constant 0 : index
    %c0_13 = arith.constant 0 : index
    %c0_14 = arith.constant 0 : index
    %13 = vector.load %arg7[%c0_12, %c0_13, %c0_14] : memref<1x1x64xf32, #tpu.memory_space<vmem>>, vector<1x1x64xf32>
    %14 = vector.shape_cast %13 : vector<1x1x64xf32> to vector<1x64xf32>
    %15 = vector.broadcast %14 : vector<1x64xf32> to vector<16x64xf32>
    %16 = arith.addf %12, %15 : vector<16x64xf32>
    %cst_15 = arith.constant 0.000000e+00 : f32
    %17 = vector.broadcast %cst_15 : f32 to vector<16x64xf32>
    %18 = arith.maximumf %16, %17 : vector<16x64xf32>
    %c0_16 = arith.constant 0 : index
    %c0_17 = arith.constant 0 : index
    %c0_18 = arith.constant 0 : index
    %19 = vector.load %arg5[%c0_16, %c0_17, %c0_18] : memref<1x64x128xf32, #tpu.memory_space<vmem>>, vector<1x64x128xf32>
    %20 = vector.shape_cast %19 : vector<1x64x128xf32> to vector<64x128xf32>
    %cst_19 = arith.constant dense<0.000000e+00> : vector<16x128xf32>
    %21 = tpu.matmul %18, %20, %cst_19 {dimension_numbers = #tpu.dot_dimension_numbers<[1], [0], [0], [1], [0, 0, 1, 1], [], []>} : vector<16x64xf32>, vector<64x128xf32>, vector<16x128xf32> -> vector<16x128xf32>
    %c0_20 = arith.constant 0 : index
    %c0_21 = arith.constant 0 : index
    %c0_22 = arith.constant 0 : index
    %22 = vector.load %arg8[%c0_20, %c0_21, %c0_22] : memref<1x1x128xf32, #tpu.memory_space<vmem>>, vector<1x1x128xf32>
    %23 = vector.shape_cast %22 : vector<1x1x128xf32> to vector<1x128xf32>
    %24 = vector.broadcast %23 : vector<1x128xf32> to vector<16x128xf32>
    %25 = arith.addf %21, %24 : vector<16x128xf32>
    %c0_23 = arith.constant 0 : index
    %c0_24 = arith.constant 0 : index
    %c0_25 = arith.constant 0 : index
    %26 = vector.load %arg9[%c0_23, %c0_24, %c0_25] : memref<1x16x128xf32, #tpu.memory_space<vmem>>, vector<1x16x128xf32>
    %27 = vector.shape_cast %26 : vector<1x16x128xf32> to vector<16x128xf32>
    %28 = vector.shape_cast %25 : vector<16x128xf32> to vector<1x16x128xf32>
    tpu.vector_store %arg9[%c0_23, %c0_24, %c0_25], %28 {strides = array<i32>} : memref<1x16x128xf32, #tpu.memory_space<vmem>>, vector<1x16x128xf32>,
    return
  }
  func.func @transform_0(%arg0: i32, %arg1: i32) -> (i32, i32) {
    %c0_i32 = arith.constant 0 : i32
    %c0_i32_0 = arith.constant 0 : i32
    return %arg0, %c0_i32 : i32, i32
  }
  func.func @transform_1(%arg0: i32, %arg1: i32) -> (i32, i32, i32) {
    %c0_i32 = arith.constant 0 : i32
    %c0_i32_0 = arith.constant 0 : i32
    %c0_i32_1 = arith.constant 0 : i32
    return %arg1, %c0_i32, %c0_i32_0 : i32, i32, i32
  }
  func.func @transform_2(%arg0: i32, %arg1: i32) -> (i32, i32, i32) {
    %c0_i32 = arith.constant 0 : i32
    %c0_i32_0 = arith.constant 0 : i32
    %c0_i32_1 = arith.constant 0 : i32
    return %arg1, %c0_i32, %c0_i32_0 : i32, i32, i32
  }
  func.func @transform_3(%arg0: i32, %arg1: i32) -> (i32, i32, i32) {
    %c0_i32 = arith.constant 0 : i32
    %c0_i32_0 = arith.constant 0 : i32
    %c0_i32_1 = arith.constant 0 : i32
    return %arg1, %c0_i32, %c0_i32_0 : i32, i32, i32
  }
  func.func @transform_4(%arg0: i32, %arg1: i32) -> (i32, i32, i32) {
    %c0_i32 = arith.constant 0 : i32
    %c0_i32_0 = arith.constant 0 : i32
    %c0_i32_1 = arith.constant 0 : i32
    return %arg1, %c0_i32, %c0_i32_0 : i32, i32, i32
  }
  func.func @transform_5(%arg0: i32, %arg1: i32) -> (i32, i32, i32) {
    %c0_i32 = arith.constant 0 : i32
    %c0_i32_0 = arith.constant 0 : i32
    %c0_i32_1 = arith.constant 0 : i32
    return %arg1, %c0_i32, %c0_i32_0 : i32, i32, i32
  }
  func.func @transform_6(%arg0: i32, %arg1: i32) -> (i32, i32, i32) {
    %c0_i32 = arith.constant 0 : i32
    %c0_i32_0 = arith.constant 0 : i32
    %c0_i32_1 = arith.constant 0 : i32
    return %arg1, %c0_i32, %c0_i32_0 : i32, i32, i32
  }
  func.func @transform_7(%arg0: i32, %arg1: i32) -> (i32, i32, i32) {
    %c0_i32 = arith.constant 0 : i32
    %c0_i32_0 = arith.constant 0 : i32
    return %arg1, %arg0, %c0_i32 : i32, i32, i32
  }
}

</mosaic_0001>

<llo_original>
// kernel: _ensemble_forward_impl.1
$region0: #{_ensemble_forward_impl.1}
  #allocation0 [shape = 'u32[]', space=smem, size = 0x4, offset = 0x4, fixed_abs, tag = 'smem constant byte address 0x4 - core index']
  #allocation1 [shape = 'u32[144,128]{1,0:T(1,128)}', space=vmem, size = 0x12000, scoped, tag = 'internal scratch']
  %s0 = inlined_call_operand.vmem [shape: f32[16,32], index: 0, kind: input, shape index: {}]
  %s1 = inlined_call_operand.hbm [shape: f32[3,32,64], index: 1, kind: input, shape index: {}]
  %s2 = inlined_call_operand.hbm [shape: f32[3,64,64], index: 2, kind: input, shape index: {}]
  %s3 = inlined_call_operand.hbm [shape: f32[3,64,128], index: 3, kind: input, shape index: {}]
  %s4 = inlined_call_operand.vmem [shape: f32[3,1,64], index: 4, kind: input, shape index: {}]
  %s5 = inlined_call_operand.vmem [shape: f32[3,1,64], index: 5, kind: input, shape index: {}]
  %s6 = inlined_call_operand.vmem [shape: f32[3,1,128], index: 6, kind: input, shape index: {}]
  %s7 = inlined_call_operand.vmem [shape: f32[3,16,128], index: 7, kind: output, shape index: {}]
  %s8 = sld [smem:[#allocation0]]
  $region73: #{_ensemble_forward_impl.1} parent=0
    _
  %s10 = ssub.s32 1, %s8
  %s11 = scalar_select 0, %s10, %s8
  $region1: #{_ensemble_forward_impl.1} parent=0
    #allocation2 [shape = 'u8[32768]{0}', space=vmem, size = 0x8000, scoped, tag = 'input window, operand 1']
    #allocation3 [shape = 's32[2]{0}', space=sflag, size = 0x8, scoped, tag = 'scoped memory for _ensemble_forward_impl.1']
    #allocation4 [shape = 'u8[65536]{0}', space=vmem, size = 0x10000, scoped, tag = 'input window, operand 2']
    #allocation5 [shape = 's32[2]{0}', space=sflag, size = 0x8, scoped, tag = 'scoped memory for _ensemble_forward_impl.1']
    #allocation6 [shape = 'u8[65536]{0}', space=vmem, size = 0x10000, scoped, tag = 'input window, operand 3']
    %12 = vsyncpa [#allocation3], 0
    %s13 = scalar_lea.sflag [#allocation3], 1
    %14 = vsyncpa %s13, 0
    %15 = vsyncpa [#allocation5], 0
    %s16 = scalar_lea.sflag [#allocation5], 1
    %17 = vsyncpa %s16, 0
    loop: start=0, step=1, limit=5
    $region2: #{_ensemble_forward_impl.1} parent=1 // loop_pre_header
      _
    $region3: #{_ensemble_forward_impl.1} parent=1 // loop_header
      %s19 = sphi 0, %s23
      %p20 = scmp.ge.s32.totalorder %s19, 5
      %s26 = sphi 0, %s38
      %s27 = sphi 0, %s34
      %s28 = sphi 0, %s26
      %s29 = sphi 0, %s27
      %s30 = sphi 0, %s28
      %s31 = sphi 0, %s29
      %s41 = sphi 0, %s43
      %s44 = sphi 0, %s41
      %s45 = sphi 0, %s44
      %s61 = sphi 0, %s45
      %s67 = sphi 0, %s69
      %s70 = sphi 0, %s67
      %s71 = sphi 0, %s70
      %s87 = sphi 0, %s71
      %s93 = sphi 0, %s95
      %s96 = sphi 0, %s93
      %s97 = sphi 0, %s96
      %s113 = sphi 0, %s97
      %s119 = sphi 0, %s121
      %s122 = sphi 0, %s119
      %s123 = sphi 0, %s122
      %s139 = sphi 0, %s123
      %s145 = sphi 0, %s147
      %s148 = sphi 0, %s145
      %s149 = sphi 0, %s148
      %s165 = sphi 0, %s149
      %s171 = sphi 0, %s173
      %s174 = sphi 0, %s171
      %s175 = sphi 0, %s174
      %s191 = sphi 0, %s175
      %s197 = sphi 0, %s199
      %s200 = sphi 0, %s197
      %s201 = sphi 0, %s200
      %s217 = sphi 0, %s201
      %s225 = sphi 0, %s227
      %s228 = sphi 0, %s225
      %s229 = sphi 0, %s228
      %s245 = sphi 0, %s229
    $region4: #{_ensemble_forward_impl.1} parent=1 // loop_header_branch
      %22 = sbr.rel (%p20) target = $region8
    $region5: #{_ensemble_forward_impl.1} parent=1 // loop_body
      %s24 = ssub.s32 %s19, 1
      %s25 = ssub.s32 %s19, 2
      %s32 = sadd.s32 1, %s27
      %p33 = scmp.ge.s32.totalorder %s32, 3
      %s34 = scalar_select %p33, 0, %s32
      %s35 = sadd.s32 1, %s26
      %s36 = scalar_select %p33, %s35, %s26
      %p37 = scmp.ge.s32.totalorder %s36, 1
      %s38 = scalar_select %p37, 0, %s36
      %s39 = ssub.s32 %s26, %s38
      %p40 = scmp.eq.s32.totalorder %s39, 0
      %s42 = sadd.s32 %s41, 1
      %s43 = scalar_select %p40, %s41, %s42
      %p46 = pneg %p40
      %p47 = scmp.eq.s32.totalorder %s19, 2
      %p48 = por %p46, %p47
      %p49 = scmp.ne.s32.totalorder %s41, %s44
      %p50 = scmp.eq.s32.totalorder %s19, 0
      %p51 = por %p49, %p50
      %p52 = scmp.ne.s32.totalorder %s41, %s44
      %p53 = scmp.eq.s32.totalorder %s24, 2
      %p54 = por %p52, %p53
      %p55 = scmp.ne.s32.totalorder %s44, %s45
      %p56 = scmp.eq.s32.totalorder %s24, 0
      %p57 = por %p55, %p56
      %p58 = scmp.ne.s32.totalorder %s44, %s45
      %p59 = scmp.eq.s32.totalorder %s25, 2
      %p60 = por %p58, %p59
      %p62 = scmp.ne.s32.totalorder %s45, %s61
      %p63 = scmp.eq.s32.totalorder %s25, 0
      %p64 = por %p62, %p63
      %s65 = ssub.s32 %s27, %s34
      %p66 = scmp.eq.s32.totalorder %s65, 0
      %s68 = sadd.s32 %s67, 1
      %s69 = scalar_select %p66, %s67, %s68
      %p72 = pneg %p66
      %p73 = scmp.eq.s32.totalorder %s19, 2
      %p74 = por %p72, %p73
      %p75 = scmp.ne.s32.totalorder %s67, %s70
      %p76 = scmp.eq.s32.totalorder %s19, 0
      %p77 = por %p75, %p76
      %p78 = scmp.ne.s32.totalorder %s67, %s70
      %p79 = scmp.eq.s32.totalorder %s24, 2
      %p80 = por %p78, %p79
      %p81 = scmp.ne.s32.totalorder %s70, %s71
      %p82 = scmp.eq.s32.totalorder %s24, 0
      %p83 = por %p81, %p82
      %p84 = scmp.ne.s32.totalorder %s70, %s71
      %p85 = scmp.eq.s32.totalorder %s25, 2
      %p86 = por %p84, %p85
      %p88 = scmp.ne.s32.totalorder %s71, %s87
      %p89 = scmp.eq.s32.totalorder %s25, 0
      %p90 = por %p88, %p89
      %s91 = ssub.s32 %s27, %s34
      %p92 = scmp.eq.s32.totalorder %s91, 0
      %s94 = sadd.s32 %s93, 1
      %s95 = scalar_select %p92, %s93, %s94
      %p98 = pneg %p92
      %p99 = scmp.eq.s32.totalorder %s19, 2
      %p100 = por %p98, %p99
      %p101 = scmp.ne.s32.totalorder %s93, %s96
      %p102 = scmp.eq.s32.totalorder %s19, 0
      %p103 = por %p101, %p102
      %p104 = scmp.ne.s32.totalorder %s93, %s96
      %p105 = scmp.eq.s32.totalorder %s24, 2
      %p106 = por %p104, %p105
      %p107 = scmp.ne.s32.totalorder %s96, %s97
      %p108 = scmp.eq.s32.totalorder %s24, 0
      %p109 = por %p107, %p108
      %p110 = scmp.ne.s32.totalorder %s96, %s97
      %p111 = scmp.eq.s32.totalorder %s25, 2
      %p112 = por %p110, %p111
      %p114 = scmp.ne.s32.totalorder %s97, %s113
      %p115 = scmp.eq.s32.totalorder %s25, 0
      %p116 = por %p114, %p115
      %s117 = ssub.s32 %s27, %s34
      %p118 = scmp.eq.s32.totalorder %s117, 0
      %s120 = sadd.s32 %s119, 1
      %s121 = scalar_select %p118, %s119, %s120
      %p124 = pneg %p118
      %p125 = scmp.eq.s32.totalorder %s19, 2
      %p126 = por %p124, %p125
      %p127 = scmp.ne.s32.totalorder %s119, %s122
      %p128 = scmp.eq.s32.totalorder %s19, 0
      %p129 = por %p127, %p128
      %p130 = scmp.ne.s32.totalorder %s119, %s122
      %p131 = scmp.eq.s32.totalorder %s24, 2
      %p132 = por %p130, %p131
      %p133 = scmp.ne.s32.totalorder %s122, %s123
      %p134 = scmp.eq.s32.totalorder %s24, 0
      %p135 = por %p133, %p134
      %p136 = scmp.ne.s32.totalorder %s122, %s123
      %p137 = scmp.eq.s32.totalorder %s25, 2
      %p138 = por %p136, %p137
      %p140 = scmp.ne.s32.totalorder %s123, %s139
      %p141 = scmp.eq.s32.totalorder %s25, 0
      %p142 = por %p140, %p141
      %s143 = ssub.s32 %s27, %s34
      %p144 = scmp.eq.s32.totalorder %s143, 0
      %s146 = sadd.s32 %s145, 1
      %s147 = scalar_select %p144, %s145, %s146
      %p150 = pneg %p144
      %p151 = scmp.eq.s32.totalorder %s19, 2
      %p152 = por %p150, %p151
      %p153 = scmp.ne.s32.totalorder %s145, %s148
      %p154 = scmp.eq.s32.totalorder %s19, 0
      %p155 = por %p153, %p154
      %p156 = scmp.ne.s32.totalorder %s145, %s148
      %p157 = scmp.eq.s32.totalorder %s24, 2
      %p158 = por %p156, %p157
      %p159 = scmp.ne.s32.totalorder %s148, %s149
      %p160 = scmp.eq.s32.totalorder %s24, 0
      %p161 = por %p159, %p160
      %p162 = scmp.ne.s32.totalorder %s148, %s149
      %p163 = scmp.eq.s32.totalorder %s25, 2
      %p164 = por %p162, %p163
      %p166 = scmp.ne.s32.totalorder %s149, %s165
      %p167 = scmp.eq.s32.totalorder %s25, 0
      %p168 = por %p166, %p167
      %s169 = ssub.s32 %s27, %s34
      %p170 = scmp.eq.s32.totalorder %s169, 0
      %s172 = sadd.s32 %s171, 1
      %s173 = scalar_select %p170, %s171, %s172
      %p176 = pneg %p170
      %p177 = scmp.eq.s32.totalorder %s19, 2
      %p178 = por %p176, %p177
      %p179 = scmp.ne.s32.totalorder %s171, %s174
      %p180 = scmp.eq.s32.totalorder %s19, 0
      %p181 = por %p179, %p180
      %p182 = scmp.ne.s32.totalorder %s171, %s174
      %p183 = scmp.eq.s32.totalorder %s24, 2
      %p184 = por %p182, %p183
      %p185 = scmp.ne.s32.totalorder %s174, %s175
      %p186 = scmp.eq.s32.totalorder %s24, 0
      %p187 = por %p185, %p186
      %p188 = scmp.ne.s32.totalorder %s174, %s175
      %p189 = scmp.eq.s32.totalorder %s25, 2
      %p190 = por %p188, %p189
      %p192 = scmp.ne.s32.totalorder %s175, %s191
      %p193 = scmp.eq.s32.totalorder %s25, 0
      %p194 = por %p192, %p193
      %s195 = ssub.s32 %s27, %s34
      %p196 = scmp.eq.s32.totalorder %s195, 0
      %s198 = sadd.s32 %s197, 1
      %s199 = scalar_select %p196, %s197, %s198
      %p202 = pneg %p196
      %p203 = scmp.eq.s32.totalorder %s19, 2
      %p204 = por %p202, %p203
      %p205 = scmp.ne.s32.totalorder %s197, %s200
      %p206 = scmp.eq.s32.totalorder %s19, 0
      %p207 = por %p205, %p206
      %p208 = scmp.ne.s32.totalorder %s197, %s200
      %p209 = scmp.eq.s32.totalorder %s24, 2
      %p210 = por %p208, %p209
      %p211 = scmp.ne.s32.totalorder %s200, %s201
      %p212 = scmp.eq.s32.totalorder %s24, 0
      %p213 = por %p211, %p212
      %p214 = scmp.ne.s32.totalorder %s200, %s201
      %p215 = scmp.eq.s32.totalorder %s25, 2
      %p216 = por %p214, %p215
      %p218 = scmp.ne.s32.totalorder %s201, %s217
      %p219 = scmp.eq.s32.totalorder %s25, 0
      %p220 = por %p218, %p219
      %s221 = ssub.s32 %s27, %s34
      %s222 = ssub.s32 %s26, %s38
      %s223 = sor.u32 %s221, %s222
      %p224 = scmp.eq.s32.totalorder %s223, 0
      %s226 = sadd.s32 %s225, 1
      %s227 = scalar_select %p224, %s225, %s226
      %p230 = pneg %p224
      %p231 = scmp.eq.s32.totalorder %s19, 2
      %p232 = por %p230, %p231
      %p233 = scmp.ne.s32.totalorder %s225, %s228
      %p234 = scmp.eq.s32.totalorder %s19, 0
      %p235 = por %p233, %p234
      %p236 = scmp.ne.s32.totalorder %s225, %s228
      %p237 = scmp.eq.s32.totalorder %s24, 2
      %p238 = por %p236, %p237
      %p239 = scmp.ne.s32.totalorder %s228, %s229
      %p240 = scmp.eq.s32.totalorder %s24, 0
      %p241 = por %p239, %p240
      %p242 = scmp.ne.s32.totalorder %s228, %s229
      %p243 = scmp.eq.s32.totalorder %s25, 2
      %p244 = por %p242, %p243
      %p246 = scmp.ne.s32.totalorder %s229, %s245
      %p247 = scmp.eq.s32.totalorder %s25, 0
      %p248 = por %p246, %p247
      %p249 = scmp.le.s32.totalorder 1, %s19
      %p250 = scmp.lt.s32.totalorder %s19, 4
      %p251 = pnand %p249, %p250
      %p252 = pneg %p251
      // Predicated region
      $region9: #{_ensemble_forward_impl.1} parent=5 // pred_check
        _
      $region10: #{_ensemble_forward_impl.1} parent=5 // pred_check_branch
        %254 = sbr.rel (%p251) target = $region12
      $region11: #{_ensemble_forward_impl.1} parent=5 // pred_region
        %s255 = ssub.s32 %s19, 1
        // Predicated region
        $region13: #{_ensemble_forward_impl.1} parent=11 // pred_check
          %p256 = pneg %p57
        $region14: #{_ensemble_forward_impl.1} parent=11 // pred_check_branch
          %258 = sbr.rel (%p256) target = $region16
        $region15: #{_ensemble_forward_impl.1} parent=11 // pred_region
          %s259 = smul.u32 2, %s28
          %p260 = scmp.lt.s32.totalorder %s259, 1
          %s261 = scalar_select %p260, %s259, 1
          %s262 = smul.addr %s261, 8
          %s263 = scalar_lea.vmem %s0, %s262
          %s264 = smul.u32 2, %s28
        $region16: #{_ensemble_forward_impl.1} parent=11 // pred_fallthru
          _
      $region12: #{_ensemble_forward_impl.1} parent=5 // pred_fallthru
        _
      %p265 = scmp.lt.s32.totalorder %s19, 3
      // Predicated region
      $region17: #{_ensemble_forward_impl.1} parent=5 // pred_check
        %p266 = pneg %p265
      $region18: #{_ensemble_forward_impl.1} parent=5 // pred_check_branch
        %268 = sbr.rel (%p266) target = $region20
      $region19: #{_ensemble_forward_impl.1} parent=5 // pred_region
        // Predicated region
        $region21: #{_ensemble_forward_impl.1} parent=19 // pred_check
          %p269 = pneg %p77
        $region22: #{_ensemble_forward_impl.1} parent=19 // pred_check_branch
          %271 = sbr.rel (%p269) target = $region24
        $region23: #{_ensemble_forward_impl.1} parent=19 // pred_region
          %s272 = sand.u32 %s67, 1
          %s273 = scalar_lea.sflag [#allocation3], %s272
          %s274 = sand.u32 %s67, 1
          %s275 = smul.addr %s274, 32
          %s276 = scalar_lea.vmem [#allocation2], %s275
          %s278 = ssub.s32 512, 512
          %279 = vsyncadd %s273, %s278
          %s280 = smul.addr %s27, 4
          %s281 = smul.addr %s280, 128
          %s282 = scalar_lea.hbm %s1, %s281
          %s283 = sshll.u32 %s276, 4
          %s284 = int_to_ptr.vmem [resolvable:$true] %s283
          %289 = dma.hbm_to_vmem [thread:$0]  %s282, 512, %s284, %s273, 128, 128, 8
        $region24: #{_ensemble_forward_impl.1} parent=19 // pred_fallthru
          _
        // Predicated region
        $region25: #{_ensemble_forward_impl.1} parent=19 // pred_check
          %p290 = pneg %p103
        $region26: #{_ensemble_forward_impl.1} parent=19 // pred_check_branch
          %292 = sbr.rel (%p290) target = $region28
        $region27: #{_ensemble_forward_impl.1} parent=19 // pred_region
          %s293 = sand.u32 %s19, 1
          %s294 = scalar_lea.sflag [#allocation5], %s293
          %s295 = sand.u32 %s93, 1
          %s296 = smul.addr %s295, 64
          %s297 = scalar_lea.vmem [#allocation4], %s296
          %s299 = ssub.s32 1024, 1024
          %300 = vsyncadd %s294, %s299
          %s301 = smul.addr %s27, 8
          %s302 = smul.addr %s301, 128
          %s303 = scalar_lea.hbm %s2, %s302
          %s304 = sshll.u32 %s297, 4
          %s305 = int_to_ptr.vmem [resolvable:$true] %s304
          %310 = dma.hbm_to_vmem [thread:$0]  %s303, 1024, %s305, %s294, 128, 128, 8
        $region28: #{_ensemble_forward_impl.1} parent=19 // pred_fallthru
          _
        // Predicated region
        $region29: #{_ensemble_forward_impl.1} parent=19 // pred_check
          %p311 = pneg %p129
        $region30: #{_ensemble_forward_impl.1} parent=19 // pred_check_branch
          %313 = sbr.rel (%p311) target = $region32
        $region31: #{_ensemble_forward_impl.1} parent=19 // pred_region
          %s314 = sand.u32 %s19, 1
          %s315 = scalar_lea.sflag [#allocation5], %s314
          %s316 = sand.u32 %s119, 1
          %s317 = smul.addr %s316, 64
          %s318 = scalar_lea.vmem [#allocation6], %s317
          %s320 = ssub.s32 1024, 1024
          %321 = vsyncadd %s315, %s320
          %s322 = smul.addr %s27, 8
          %s323 = smul.addr %s322, 128
          %s324 = scalar_lea.hbm %s3, %s323
          %s325 = sshll.u32 %s318, 4
          %s326 = int_to_ptr.vmem [resolvable:$true] %s325
          %331 = dma.hbm_to_vmem [thread:$0]  %s324, 1024, %s326, %s315, 128, 128, 8
        $region32: #{_ensemble_forward_impl.1} parent=19 // pred_fallthru
          _
        // Predicated region
        $region33: #{_ensemble_forward_impl.1} parent=19 // pred_check
          %p332 = pneg %p155
        $region34: #{_ensemble_forward_impl.1} parent=19 // pred_check_branch
          %334 = sbr.rel (%p332) target = $region36
        $region35: #{_ensemble_forward_impl.1} parent=19 // pred_region
          %p335 = scmp.lt.s32.totalorder %s27, 2
          %s336 = scalar_select %p335, %s27, 2
          %s337 = scalar_lea.vmem %s4, %s336
        $region36: #{_ensemble_forward_impl.1} parent=19 // pred_fallthru
          _
        // Predicated region
        $region37: #{_ensemble_forward_impl.1} parent=19 // pred_check
          %p338 = pneg %p181
        $region38: #{_ensemble_forward_impl.1} parent=19 // pred_check_branch
          %340 = sbr.rel (%p338) target = $region40
        $region39: #{_ensemble_forward_impl.1} parent=19 // pred_region
          %p341 = scmp.lt.s32.totalorder %s27, 2
          %s342 = scalar_select %p341, %s27, 2
          %s343 = scalar_lea.vmem %s5, %s342
        $region40: #{_ensemble_forward_impl.1} parent=19 // pred_fallthru
          _
        // Predicated region
        $region41: #{_ensemble_forward_impl.1} parent=19 // pred_check
          %p344 = pneg %p207
        $region42: #{_ensemble_forward_impl.1} parent=19 // pred_check_branch
          %346 = sbr.rel (%p344) target = $region44
        $region43: #{_ensemble_forward_impl.1} parent=19 // pred_region
          %p347 = scmp.lt.s32.totalorder %s27, 2
          %s348 = scalar_select %p347, %s27, 2
          %s349 = scalar_lea.vmem %s6, %s348
        $region44: #{_ensemble_forward_impl.1} parent=19 // pred_fallthru
          _
      $region20: #{_ensemble_forward_impl.1} parent=5 // pred_fallthru
        _
      %p350 = scmp.le.s32.totalorder 1, %s19
      %p351 = scmp.lt.s32.totalorder %s19, 4
      %p352 = pnand %p350, %p351
      %p353 = pneg %p352
      // Predicated region
      $region45: #{_ensemble_forward_impl.1} parent=5 // pred_check
        _
      $region46: #{_ensemble_forward_impl.1} parent=5 // pred_check_branch
        %355 = sbr.rel (%p352) target = $region48
      $region47: #{_ensemble_forward_impl.1} parent=5 // pred_region
        %s356 = ssub.s32 %s19, 1
        %s357 = sand.u32 %s70, 1
        %s358 = scalar_lea.sflag [#allocation3], %s357
        %s359 = sand.u32 %s70, 1
        %s360 = smul.addr %s359, 32
        %s361 = scalar_lea.vmem [#allocation2], %s360
        // Predicated region
        $region49: #{_ensemble_forward_impl.1} parent=47 // pred_check
          %p362 = pneg %p83
        $region50: #{_ensemble_forward_impl.1} parent=47 // pred_check_branch
          %364 = sbr.rel (%p362) target = $region52
        $region51: #{_ensemble_forward_impl.1} parent=47 // pred_region
          %365 = dma.done %s358, 512
        $region52: #{_ensemble_forward_impl.1} parent=47 // pred_fallthru
          _
        %s366 = sand.u32 %s24, 1
        %s367 = scalar_lea.sflag [#allocation5], %s366
        %s368 = sand.u32 %s96, 1
        %s369 = smul.addr %s368, 64
        %s370 = scalar_lea.vmem [#allocation4], %s369
        // Predicated region
        $region53: #{_ensemble_forward_impl.1} parent=47 // pred_check
          %p371 = pneg %p109
        $region54: #{_ensemble_forward_impl.1} parent=47 // pred_check_branch
          %373 = sbr.rel (%p371) target = $region56
        $region55: #{_ensemble_forward_impl.1} parent=47 // pred_region
          %374 = dma.done %s367, 1024
        $region56: #{_ensemble_forward_impl.1} parent=47 // pred_fallthru
          _
        %s375 = sand.u32 %s24, 1
        %s376 = scalar_lea.sflag [#allocation5], %s375
        %s377 = sand.u32 %s122, 1
        %s378 = smul.addr %s377, 64
        %s379 = scalar_lea.vmem [#allocation6], %s378
        // Predicated region
        $region57: #{_ensemble_forward_impl.1} parent=47 // pred_check
          %p380 = pneg %p135
        $region58: #{_ensemble_forward_impl.1} parent=47 // pred_check_branch
          %382 = sbr.rel (%p380) target = $region60
        $region59: #{_ensemble_forward_impl.1} parent=47 // pred_region
          %383 = dma.done %s376, 1024
        $region60: #{_ensemble_forward_impl.1} parent=47 // pred_fallthru
          _
        %s384 = smul.u32 2, %s28
        %p385 = scmp.lt.s32.totalorder %s384, 1
        %s386 = scalar_select %p385, %s384, 1
        %s387 = smul.addr %s386, 8
        %s388 = scalar_lea.vmem %s0, %s387
        %p389 = pneg %p57
        %p390 = pneg %p54
        %s391 = sand.u32 %s70, 1
        %s392 = scalar_lea.sflag [#allocation3], %s391
        %s393 = sand.u32 %s70, 1
        %s394 = smul.addr %s393, 32
        %s395 = scalar_lea.vmem [#allocation2], %s394
        %p396 = pneg %p83
        %p397 = pneg %p80
        %s398 = sand.u32 %s24, 1
        %s399 = scalar_lea.sflag [#allocation5], %s398
        %s400 = sand.u32 %s96, 1
        %s401 = smul.addr %s400, 64
        %s402 = scalar_lea.vmem [#allocation4], %s401
        %p403 = pneg %p109
        %p404 = pneg %p106
        %s405 = sand.u32 %s24, 1
        %s406 = scalar_lea.sflag [#allocation5], %s405
        %s407 = sand.u32 %s122, 1
        %s408 = smul.addr %s407, 64
        %s409 = scalar_lea.vmem [#allocation6], %s408
        %p410 = pneg %p135
        %p411 = pneg %p132
        %p412 = scmp.lt.s32.totalorder %s29, 2
        %s413 = scalar_select %p412, %s29, 2
        %s414 = scalar_lea.vmem %s4, %s413
        %p415 = pneg %p161
        %p416 = pneg %p158
        %p417 = scmp.lt.s32.totalorder %s29, 2
        %s418 = scalar_select %p417, %s29, 2
        %s419 = scalar_lea.vmem %s5, %s418
        %p420 = pneg %p187
        %p421 = pneg %p184
        %p422 = scmp.lt.s32.totalorder %s29, 2
        %s423 = scalar_select %p422, %s29, 2
        %s424 = scalar_lea.vmem %s6, %s423
        %p425 = pneg %p213
        %p426 = pneg %p210
        %p427 = pneg %p241
        %p428 = pneg %p238
        %s429 = smul.u32 2, %s28
        %p430 = scmp.lt.s32.totalorder %s29, 2
        %s431 = scalar_select %p430, %s29, 2
        %p432 = scmp.lt.s32.totalorder %s429, 1
        %s433 = scalar_select %p432, %s429, 1
        %s434 = smul.addr %s431, 2
        %s435 = sadd.s32 %s433, %s434
        %s436 = smul.addr %s435, 8
        %s437 = scalar_lea.vmem %s7, %s436
        %s438 = smul.u32 2, %s28
        %p439 = scmp.lt.s32.totalorder %s438, 1
        %s440 = scalar_select %p439, %s438, 1
        %s441 = smul.addr %s440, 8
        %s442 = scalar_lea.vmem %s0, %s441
        %s443 = smul.u32 2, %s28
        %p444 = scmp.lt.s32.totalorder %s29, 2
        %s445 = scalar_select %p444, %s29, 2
        %s446 = scalar_lea.vmem %s4, %s445
        %p447 = scmp.lt.s32.totalorder %s29, 2
        %s448 = scalar_select %p447, %s29, 2
        %s449 = scalar_lea.vmem %s5, %s448
        %p450 = scmp.lt.s32.totalorder %s29, 2
        %s451 = scalar_select %p450, %s29, 2
        %s452 = scalar_lea.vmem %s6, %s451
        %s453 = smul.u32 2, %s28
        %p454 = scmp.lt.s32.totalorder %s29, 2
        %s455 = scalar_select %p454, %s29, 2
        %p456 = scmp.lt.s32.totalorder %s453, 1
        %s457 = scalar_select %p456, %s453, 1
        %s458 = smul.addr %s455, 2
        %s459 = sadd.s32 %s457, %s458
        %s460 = smul.addr %s459, 8
        %s461 = scalar_lea.vmem %s7, %s460
        %s462 = smul.u32 2, %s28
        %v463 = vld [vmem:[%s442] sm:$0xff]
        %v464 = vld [vmem:[%s442 + $0x8] sm:$0xff]
        %v465 = vld [vmem:[%s361] sm:$0xff]
        %v466 = vld [vmem:[%s361 + $0x8] sm:$0xff]
        %v467 = vld [vmem:[%s361 + $0x10] sm:$0xff]
        %v468 = vld [vmem:[%s361 + $0x18] sm:$0xff]
        %v469 = vld [vmem:[%s446] sm:$0x1]
        %v471 = vlaneseq
        %v472 = vshrl.u32 %v471, 7
        %v473 = vsub.s32 0, %v472
        %v474 = vrot.slane %v469, %v473
        %vm476 = vcmask 261120
        %v478 = vsel %vm476, %v463, 0
        %v481 = vsel %vm476, %v464, 0
        %483 = vmatprep.subr.mxu0 0.0
        %484 = vmatpush1.msra.mxu0 %v465
        %485 = vmatprep.subr.mxu0 0.0
        %486 = vmatpush1.msra.mxu0 %v466
        %487 = vmatprep.subr.mxu0 0.0
        %488 = vmatpush1.msra.mxu0 %v467
        %489 = vmatprep.subr.mxu0 0.0
        %490 = vmatpush1.msra.mxu0 %v468
        %491 = vmatprep.subr.mxu0 0.0
        %492 = vmatpush1.msra.mxu0 0.0
        %493 = vmatprep.subr.mxu0 0.0
        %494 = vmatpush1.msra.mxu0 0.0
        %495 = vmatprep.subr.mxu0 0.0
        %496 = vmatpush1.msra.mxu0 0.0
        %497 = vmatprep.subr.mxu0 0.0
        %498 = vmatpush1.msra.mxu0 0.0
        %499 = vmatprep.subr.mxu0 0.0
        %500 = vmatpush1.msra.mxu0 0.0
        %501 = vmatprep.subr.mxu0 0.0
        %502 = vmatpush1.msra.mxu0 0.0
        %503 = vmatprep.subr.mxu0 0.0
        %504 = vmatpush1.msra.mxu0 0.0
        %505 = vmatprep.subr.mxu0 0.0
        %506 = vmatpush1.msra.mxu0 0.0
        %507 = vmatprep.subr.mxu0 0.0
        %508 = vmatpush1.msra.mxu0 0.0
        %509 = vmatprep.subr.mxu0 0.0
        %510 = vmatpush1.msra.mxu0 0.0
        %511 = vmatprep.subr.mxu0 0.0
        %512 = vmatpush1.msra.mxu0 0.0
        %513 = vmatprep.subr.mxu0 0.0
        %514 = vmatpush1.msra.mxu0 0.0
        %515 = vmatprep.subr.mxu0 0.0
        %516 = vmatpush1.msra.mxu0 0.0
        %517 = vmatprep.subr.mxu0 0.0
        %518 = vmatpush1.msra.mxu0 0.0
        %519 = vmatprep.subr.mxu0 0.0
        %520 = vmatpush1.msra.mxu0 0.0
        %521 = vmatprep.subr.mxu0 0.0
        %522 = vmatpush1.msra.mxu0 0.0
        %523 = vmatprep.subr.mxu0 0.0
        %524 = vmatpush1.msra.mxu0 0.0
        %525 = vmatprep.subr.mxu0 0.0
        %526 = vmatpush1.msra.mxu0 0.0
        %527 = vmatprep.subr.mxu0 0.0
        %528 = vmatpush1.msra.mxu0 0.0
        %529 = vmatprep.subr.mxu0 0.0
        %530 = vmatpush1.msra.mxu0 0.0
        %531 = vmatprep.subr.mxu0 0.0
        %532 = vmatpush1.msra.mxu0 0.0
        %533 = vmatprep.subr.mxu0 0.0
        %534 = vmatpush1.msra.mxu0 0.0
        %535 = vmatprep.subr.mxu0 0.0
        %536 = vmatpush1.msra.mxu0 0.0
        %537 = vmatprep.subr.mxu0 0.0
        %538 = vmatpush1.msra.mxu0 0.0
        %539 = vmatprep.subr.mxu0 0.0
        %540 = vmatpush1.msra.mxu0 0.0
        %541 = vmatprep.subr.mxu0 0.0
        %542 = vmatpush1.msra.mxu0 0.0
        %543 = vmatprep.subr.mxu0 0.0
        %544 = vmatpush1.msra.mxu0 0.0
        %545 = vmatprep.subr.mxu0 0.0
        %546 = vmatpush1.msra.mxu0 0.0
        %547 = vmatprep.mubr.f32.mxu0 0.0
        %548 = vmatmul.mubr.f32.gmra.mrb[0].mxu0 %v478
        %v549 = vpop.f32.mrb[0].mxu0
        %v550 = vadd.f32 %v474, %v549
        %v551 = vpop.f32.mrb[0].mxu0
        %552 = vmatprep.mubr.f32.mxu0 0.0
        %553 = vmatmul.mubr.f32.gmra.mrb[0].mxu0 %v481
        %v554 = vpop.f32.mrb[0].mxu0
        %v555 = vadd.f32 %v474, %v554
        %v556 = vpop.f32.mrb[0].mxu0
        %557 = vdwg.mxu0
        %v558 = vmax.f32 %v550, 0.0
        %v559 = vmax.f32 %v555, 0.0
        %v560 = vld [vmem:[%s370] sm:$0xff]
        %v561 = vld [vmem:[%s370 + $0x8] sm:$0xff]
        %v562 = vld [vmem:[%s370 + $0x10] sm:$0xff]
        %v563 = vld [vmem:[%s370 + $0x18] sm:$0xff]
        %v564 = vld [vmem:[%s370 + $0x20] sm:$0xff]
        %v565 = vld [vmem:[%s370 + $0x28] sm:$0xff]
        %v566 = vld [vmem:[%s370 + $0x30] sm:$0xff]
        %v567 = vld [vmem:[%s370 + $0x38] sm:$0xff]
        %v568 = vld [vmem:[%s449] sm:$0x1]
        %v570 = vlaneseq
        %v571 = vshrl.u32 %v570, 7
        %v572 = vsub.s32 0, %v571
        %v573 = vrot.slane %v568, %v572
        %vm575 = vcmask 523264
        %v577 = vsel %vm575, %v558, 0
        %v580 = vsel %vm575, %v559, 0
        %582 = vmatprep.subr.mxu0 0.0
        %583 = vmatpush1.msra.mxu0 %v560
        %584 = vmatprep.subr.mxu0 0.0
        %585 = vmatpush1.msra.mxu0 %v561
        %586 = vmatprep.subr.mxu0 0.0
        %587 = vmatpush1.msra.mxu0 %v562
        %588 = vmatprep.subr.mxu0 0.0
        %589 = vmatpush1.msra.mxu0 %v563
        %590 = vmatprep.subr.mxu0 0.0
        %591 = vmatpush1.msra.mxu0 %v564
        %592 = vmatprep.subr.mxu0 0.0
        %593 = vmatpush1.msra.mxu0 %v565
        %594 = vmatprep.subr.mxu0 0.0
        %595 = vmatpush1.msra.mxu0 %v566
        %596 = vmatprep.subr.mxu0 0.0
        %597 = vmatpush1.msra.mxu0 %v567
        %598 = vmatprep.subr.mxu0 0.0
        %599 = vmatpush1.msra.mxu0 0.0
        %600 = vmatprep.subr.mxu0 0.0
        %601 = vmatpush1.msra.mxu0 0.0
        %602 = vmatprep.subr.mxu0 0.0
        %603 = vmatpush1.msra.mxu0 0.0
        %604 = vmatprep.subr.mxu0 0.0
        %605 = vmatpush1.msra.mxu0 0.0
        %606 = vmatprep.subr.mxu0 0.0
        %607 = vmatpush1.msra.mxu0 0.0
        %608 = vmatprep.subr.mxu0 0.0
        %609 = vmatpush1.msra.mxu0 0.0
        %610 = vmatprep.subr.mxu0 0.0
        %611 = vmatpush1.msra.mxu0 0.0
        %612 = vmatprep.subr.mxu0 0.0
        %613 = vmatpush1.msra.mxu0 0.0
        %614 = vmatprep.subr.mxu0 0.0
        %615 = vmatpush1.msra.mxu0 0.0
        %616 = vmatprep.subr.mxu0 0.0
        %617 = vmatpush1.msra.mxu0 0.0
        %618 = vmatprep.subr.mxu0 0.0
        %619 = vmatpush1.msra.mxu0 0.0
        %620 = vmatprep.subr.mxu0 0.0
        %621 = vmatpush1.msra.mxu0 0.0
        %622 = vmatprep.subr.mxu0 0.0
        %623 = vmatpush1.msra.mxu0 0.0
        %624 = vmatprep.subr.mxu0 0.0
        %625 = vmatpush1.msra.mxu0 0.0
        %626 = vmatprep.subr.mxu0 0.0
        %627 = vmatpush1.msra.mxu0 0.0
        %628 = vmatprep.subr.mxu0 0.0
        %629 = vmatpush1.msra.mxu0 0.0
        %630 = vmatprep.subr.mxu0 0.0
        %631 = vmatpush1.msra.mxu0 0.0
        %632 = vmatprep.subr.mxu0 0.0
        %633 = vmatpush1.msra.mxu0 0.0
        %634 = vmatprep.subr.mxu0 0.0
        %635 = vmatpush1.msra.mxu0 0.0
        %636 = vmatprep.subr.mxu0 0.0
        %637 = vmatpush1.msra.mxu0 0.0
        %638 = vmatprep.subr.mxu0 0.0
        %639 = vmatpush1.msra.mxu0 0.0
        %640 = vmatprep.subr.mxu0 0.0
        %641 = vmatpush1.msra.mxu0 0.0
        %642 = vmatprep.subr.mxu0 0.0
        %643 = vmatpush1.msra.mxu0 0.0
        %644 = vmatprep.subr.mxu0 0.0
        %645 = vmatpush1.msra.mxu0 0.0
        %646 = vmatprep.mubr.f32.mxu0 0.0
        %647 = vmatmul.mubr.f32.gmra.mrb[0].mxu0 %v577
        %v648 = vpop.f32.mrb[0].mxu0
        %v649 = vadd.f32 %v573, %v648
        %v650 = vpop.f32.mrb[0].mxu0
        %651 = vmatprep.mubr.f32.mxu0 0.0
        %652 = vmatmul.mubr.f32.gmra.mrb[0].mxu0 %v580
        %v653 = vpop.f32.mrb[0].mxu0
        %v654 = vadd.f32 %v573, %v653
        %v655 = vpop.f32.mrb[0].mxu0
        %656 = vdwg.mxu0
        %v657 = vmax.f32 %v649, 0.0
        %v658 = vmax.f32 %v654, 0.0
        %v659 = vld [vmem:[%s379] sm:$0xff]
        %v660 = vld [vmem:[%s379 + $0x8] sm:$0xff]
        %v661 = vld [vmem:[%s379 + $0x10] sm:$0xff]
        %v662 = vld [vmem:[%s379 + $0x18] sm:$0xff]
        %v663 = vld [vmem:[%s379 + $0x20] sm:$0xff]
        %v664 = vld [vmem:[%s379 + $0x28] sm:$0xff]
        %v665 = vld [vmem:[%s379 + $0x30] sm:$0xff]
        %v666 = vld [vmem:[%s379 + $0x38] sm:$0xff]
        %v667 = vld [vmem:[%s452] sm:$0x1]
        %v669 = vlaneseq
        %v670 = vshrl.u32 %v669, 7
        %v671 = vsub.s32 0, %v670
        %v672 = vrot.slane %v667, %v671
        %v675 = vsel %vm575, %v657, 0
        %v678 = vsel %vm575, %v658, 0
        %680 = vmatprep.subr.mxu0 0.0
        %681 = vmatpush1.msra.mxu0 %v659
        %682 = vmatprep.subr.mxu0 0.0
        %683 = vmatpush1.msra.mxu0 %v660
        %684 = vmatprep.subr.mxu0 0.0
        %685 = vmatpush1.msra.mxu0 %v661
        %686 = vmatprep.subr.mxu0 0.0
        %687 = vmatpush1.msra.mxu0 %v662
        %688 = vmatprep.subr.mxu0 0.0
        %689 = vmatpush1.msra.mxu0 %v663
        %690 = vmatprep.subr.mxu0 0.0
        %691 = vmatpush1.msra.mxu0 %v664
        %692 = vmatprep.subr.mxu0 0.0
        %693 = vmatpush1.msra.mxu0 %v665
        %694 = vmatprep.subr.mxu0 0.0
        %695 = vmatpush1.msra.mxu0 %v666
        %696 = vmatprep.subr.mxu0 0.0
        %697 = vmatpush1.msra.mxu0 0.0
        %698 = vmatprep.subr.mxu0 0.0
        %699 = vmatpush1.msra.mxu0 0.0
        %700 = vmatprep.subr.mxu0 0.0
        %701 = vmatpush1.msra.mxu0 0.0
        %702 = vmatprep.subr.mxu0 0.0
        %703 = vmatpush1.msra.mxu0 0.0
        %704 = vmatprep.subr.mxu0 0.0
        %705 = vmatpush1.msra.mxu0 0.0
        %706 = vmatprep.subr.mxu0 0.0
        %707 = vmatpush1.msra.mxu0 0.0
        %708 = vmatprep.subr.mxu0 0.0
        %709 = vmatpush1.msra.mxu0 0.0
        %710 = vmatprep.subr.mxu0 0.0
        %711 = vmatpush1.msra.mxu0 0.0
        %712 = vmatprep.subr.mxu0 0.0
        %713 = vmatpush1.msra.mxu0 0.0
        %714 = vmatprep.subr.mxu0 0.0
        %715 = vmatpush1.msra.mxu0 0.0
        %716 = vmatprep.subr.mxu0 0.0
        %717 = vmatpush1.msra.mxu0 0.0
        %718 = vmatprep.subr.mxu0 0.0
        %719 = vmatpush1.msra.mxu0 0.0
        %720 = vmatprep.subr.mxu0 0.0
        %721 = vmatpush1.msra.mxu0 0.0
        %722 = vmatprep.subr.mxu0 0.0
        %723 = vmatpush1.msra.mxu0 0.0
        %724 = vmatprep.subr.mxu0 0.0
        %725 = vmatpush1.msra.mxu0 0.0
        %726 = vmatprep.subr.mxu0 0.0
        %727 = vmatpush1.msra.mxu0 0.0
        %728 = vmatprep.subr.mxu0 0.0
        %729 = vmatpush1.msra.mxu0 0.0
        %730 = vmatprep.subr.mxu0 0.0
        %731 = vmatpush1.msra.mxu0 0.0
        %732 = vmatprep.subr.mxu0 0.0
        %733 = vmatpush1.msra.mxu0 0.0
        %734 = vmatprep.subr.mxu0 0.0
        %735 = vmatpush1.msra.mxu0 0.0
        %736 = vmatprep.subr.mxu0 0.0
        %737 = vmatpush1.msra.mxu0 0.0
        %738 = vmatprep.subr.mxu0 0.0
        %739 = vmatpush1.msra.mxu0 0.0
        %740 = vmatprep.subr.mxu0 0.0
        %741 = vmatpush1.msra.mxu0 0.0
        %742 = vmatprep.subr.mxu0 0.0
        %743 = vmatpush1.msra.mxu0 0.0
        %744 = vmatprep.mubr.f32.mxu0 0.0
        %745 = vmatmul.mubr.f32.gmra.mrb[0].mxu0 %v675
        %v746 = vpop.f32.mrb[0].mxu0
        %v747 = vadd.f32 %v672, %v746
        %v748 = vpop.f32.mrb[0].mxu0
        %749 = vmatprep.mubr.f32.mxu0 0.0
        %750 = vmatmul.mubr.f32.gmra.mrb[0].mxu0 %v678
        %v751 = vpop.f32.mrb[0].mxu0
        %v752 = vadd.f32 %v672, %v751
        %v753 = vpop.f32.mrb[0].mxu0
        %754 = vdwg.mxu0
        %755 = vst [vmem:[%s461] sm:$0xff] %v747
        %756 = vst [vmem:[%s461 + $0x8] sm:$0xff] %v752
        %s757 = smul.u32 2, %s28
        %p758 = scmp.lt.s32.totalorder %s29, 2
        %s759 = scalar_select %p758, %s29, 2
        %p760 = scmp.lt.s32.totalorder %s757, 1
        %s761 = scalar_select %p760, %s757, 1
        %s762 = smul.addr %s759, 2
        %s763 = sadd.s32 %s761, %s762
        %s764 = smul.addr %s763, 8
        %s765 = scalar_lea.vmem %s7, %s764
        // Predicated region
        $region61: #{_ensemble_forward_impl.1} parent=47 // pred_check
          %p766 = pneg %p238
        $region62: #{_ensemble_forward_impl.1} parent=47 // pred_check_branch
          %768 = sbr.rel (%p766) target = $region64
        $region63: #{_ensemble_forward_impl.1} parent=47 // pred_region
          %s769 = smul.u32 2, %s28
        $region64: #{_ensemble_forward_impl.1} parent=47 // pred_fallthru
          _
      $region48: #{_ensemble_forward_impl.1} parent=5 // pred_fallthru
        _
      %p770 = scmp.le.s32.totalorder 2, %s19
      // Predicated region
      $region65: #{_ensemble_forward_impl.1} parent=5 // pred_check
        %p771 = pneg %p770
      $region66: #{_ensemble_forward_impl.1} parent=5 // pred_check_branch
        %773 = sbr.rel (%p771) target = $region68
      $region67: #{_ensemble_forward_impl.1} parent=5 // pred_region
        %s774 = ssub.s32 %s19, 2
        // Predicated region
        $region69: #{_ensemble_forward_impl.1} parent=67 // pred_check
          %p775 = pneg %p244
        $region70: #{_ensemble_forward_impl.1} parent=67 // pred_check_branch
          %777 = sbr.rel (%p775) target = $region72
        $region71: #{_ensemble_forward_impl.1} parent=67 // pred_region
          %s778 = smul.u32 2, %s30
          %p779 = scmp.lt.s32.totalorder %s31, 2
          %s780 = scalar_select %p779, %s31, 2
          %p781 = scmp.lt.s32.totalorder %s778, 1
          %s782 = scalar_select %p781, %s778, 1
          %s783 = smul.addr %s780, 2
          %s784 = sadd.s32 %s782, %s783
          %s785 = smul.addr %s784, 8
          %s786 = scalar_lea.vmem %s7, %s785
        $region72: #{_ensemble_forward_impl.1} parent=67 // pred_fallthru
          _
      $region68: #{_ensemble_forward_impl.1} parent=5 // pred_fallthru
        _
    $region6: #{_ensemble_forward_impl.1} parent=1 // loop_footer
      %s23 = sadd.s32 1, %s19
    $region7: #{_ensemble_forward_impl.1} parent=1 // loop_footer_branch
      %18 = sbr.rel target = $region3
    $region8: #{_ensemble_forward_impl.1} parent=1 // loop_exit
      _
    %787 = vsyncpa [#allocation3], 1
    %s788 = scalar_lea.sflag [#allocation3], 1
    %789 = vsyncpa %s788, 1
    %790 = vsyncpa [#allocation5], 1
    %s791 = scalar_lea.sflag [#allocation5], 1
    %792 = vsyncpa %s791, 1

</llo_original>
